<compile_context>
chip_gen: v7x
topology: tpu7x:2x2x1
jax: 0.10.0
libtpu: 0.0.40
codegen_flags: <defaults>
</compile_context>

<pallas_src>
import functools

import jax
import jax.numpy as jnp
from jax.experimental import pallas as pl
from jax.experimental.pallas import tpu as pltpu


def get_tau(epoch, t_max=5.0, t_min=0.5, total_epochs=1000):
    return t_max * (t_min / t_max) ** (min(epoch, total_epochs) / total_epochs)


def _binary_concrete_kernel(x_ref, o_ref, *, inv_tau, eps, seed):
    tile_r, lane = x_ref.shape
    x = x_ref[...].astype(jnp.float32)

    # ---- counter-based uniform PRNG ------------------------------------
    # splitmix32-style hash of (seed, global flat element index).
    # Different tiles hash different counters -> no repeated noise.
    row_ids = jax.lax.broadcasted_iota(jnp.int32, (tile_r, lane), 0)
    col_ids = jax.lax.broadcasted_iota(jnp.int32, (tile_r, lane), 1)
    base_row = pl.program_id(0) * tile_r
    gidx = ((base_row + row_ids) * lane + col_ids).astype(jnp.uint32)

    h = gidx + jnp.uint32(seed & 0xFFFFFFFF) * jnp.uint32(0x9E3779B9)
    h = (h ^ (h >> 16)) * jnp.uint32(0x7FEB352D)
    h = (h ^ (h >> 15)) * jnp.uint32(0x846CA68B)
    h = h ^ (h >> 16)

    # Top 24 bits -> uniform in [0, 1).
    u = (h >> 8).astype(jnp.int32).astype(jnp.float32) * jnp.float32(
        1.0 / 16777216.0)

    # ---- logistic noise + sigmoid ---------------------------------------
    # Fused:  log(u+eps) - log(1-u+eps) == log((u+eps)/(1-u+eps))
    logistic = jnp.log((u + eps) / (1.0 - u + eps))

    o_ref[...] = jax.nn.sigmoid((x + logistic) * inv_tau).astype(o_ref.dtype)


def binary_concrete(x_nchw, epoch, seed=0, eps=1e-20):
    """Pallas implementation of BinaryConcrete.forward.

    x_nchw: float array (any shape; NCHW in the reference module).
    epoch:  python int used only for the (static) temperature schedule.
    seed:   python int seed for the in-kernel uniform noise.
    """
    orig_shape = x_nchw.shape
    dtype = x_nchw.dtype
    total = 1
    for d in orig_shape:
        total *= int(d)

    # Lane-dense 2D view: (rows, 1024). Pad so the block shape is always
    # (multiple of 8, multiple of 128).
    LANE = 1024
    TILE_R_MAX = 512                      # 512*1024*4B = 2 MiB per f32 tile
    rows = -(-total // LANE)
    tile_r = min(TILE_R_MAX, -(-rows // 8) * 8)
    rows_padded = -(-rows // tile_r) * tile_r
    padded_total = rows_padded * LANE

    x_flat = x_nchw.reshape(-1)
    if padded_total != total:
        x_flat = jnp.pad(x_flat, (0, padded_total - total))
    x2d = x_flat.reshape(rows_padded, LANE)

    inv_tau = 1.0 / get_tau(epoch)        # static -> baked into the kernel
    kernel = functools.partial(
        _binary_concrete_kernel,
        inv_tau=float(inv_tau), eps=float(eps), seed=int(seed))

    grid = (rows_padded // tile_r,)
    out2d = pl.pallas_call(
        kernel,
        out_shape=jax.ShapeDtypeStruct((rows_padded, LANE), dtype),
        grid=grid,
        in_specs=[pl.BlockSpec((tile_r, LANE), lambda i: (i, 0))],
        out_specs=pl.BlockSpec((tile_r, LANE), lambda i: (i, 0)),
        compiler_params=pltpu.CompilerParams(
            dimension_semantics=("parallel",)),
    )(x2d)

    return out2d.reshape(-1)[:total].reshape(orig_shape)


if __name__ == "__main__":
    key = jax.random.PRNGKey(0)
    # Small NCHW input consistent with the module's usage.
    x = jax.random.normal(key, (2, 4, 16, 16), dtype=jnp.float32)

    out = binary_concrete(x, epoch=10, seed=0)
    out = jax.block_until_ready(out)

    assert out.shape == x.shape, out.shape
    assert out.dtype == x.dtype, out.dtype
    assert bool(jnp.all(jnp.isfinite(out)))
    # sigmoid output must lie in (0, 1)
    assert bool(jnp.all(out > 0.0)) and bool(jnp.all(out < 1.0))

    print("KERNEL_OK")
</pallas_src>

<mosaic_0001>
module attributes {stable_mosaic.version = 11 : i64} {
  func.func @_binary_concrete_kernel(%arg0: i32, %arg1: memref<8x1024xf32, #tpu.memory_space<vmem>>, %arg2: memref<8x1024xf32, #tpu.memory_space<vmem>>) attributes {dimension_semantics = [#tpu.dimension_semantics<parallel>], iteration_bounds = array<i64: 1>, scalar_prefetch = 0 : i64, scratch_operands = 0 : i64, tpu.core_type = #tpu.core_type<tc>, window_params = [{transform_indices = @transform_0, window_bounds = array<i64: 8, 1024>}, {transform_indices = @transform_1, window_bounds = array<i64: 8, 1024>}]} {
    %c0 = arith.constant 0 : index
    %c0_0 = arith.constant 0 : index
    %0 = vector.load %arg1[%c0, %c0_0] : memref<8x1024xf32, #tpu.memory_space<vmem>>, vector<8x1024xf32>
    %1 = tpu.iota {dimensions = array<i32: 0>} : vector<8x1024xi32>
    %2 = tpu.iota {dimensions = array<i32: 1>} : vector<8x1024xi32>
    %c8_i32 = arith.constant 8 : i32
    %3 = arith.muli %arg0, %c8_i32 : i32
    %4 = vector.broadcast %3 : i32 to vector<8x1024xi32>
    %5 = arith.addi %4, %1 : vector<8x1024xi32>
    %c1024_i32 = arith.constant 1024 : i32
    %6 = vector.broadcast %c1024_i32 : i32 to vector<8x1024xi32>
    %7 = arith.muli %5, %6 : vector<8x1024xi32>
    %8 = arith.addi %7, %2 : vector<8x1024xi32>
    %c0_i32 = arith.constant 0 : i32
    %c-1640531527_i32 = arith.constant -1640531527 : i32
    %9 = arith.muli %c0_i32, %c-1640531527_i32 : i32
    %10 = vector.broadcast %9 : i32 to vector<8x1024xi32>
    %11 = arith.addi %8, %10 : vector<8x1024xi32>
    %c16_i32 = arith.constant 16 : i32
    %12 = vector.broadcast %c16_i32 : i32 to vector<8x1024xi32>
    %13 = arith.shrui %11, %12 : vector<8x1024xi32>
    %14 = arith.xori %11, %13 : vector<8x1024xi32>
    %c2146121005_i32 = arith.constant 2146121005 : i32
    %15 = vector.broadcast %c2146121005_i32 : i32 to vector<8x1024xi32>
    %16 = arith.muli %14, %15 : vector<8x1024xi32>
    %c15_i32 = arith.constant 15 : i32
    %17 = vector.broadcast %c15_i32 : i32 to vector<8x1024xi32>
    %18 = arith.shrui %16, %17 : vector<8x1024xi32>
    %19 = arith.xori %16, %18 : vector<8x1024xi32>
    %c-2073254261_i32 = arith.constant -2073254261 : i32
    %20 = vector.broadcast %c-2073254261_i32 : i32 to vector<8x1024xi32>
    %21 = arith.muli %19, %20 : vector<8x1024xi32>
    %c16_i32_1 = arith.constant 16 : i32
    %22 = vector.broadcast %c16_i32_1 : i32 to vector<8x1024xi32>
    %23 = arith.shrui %21, %22 : vector<8x1024xi32>
    %24 = arith.xori %21, %23 : vector<8x1024xi32>
    %c8_i32_2 = arith.constant 8 : i32
    %25 = vector.broadcast %c8_i32_2 : i32 to vector<8x1024xi32>
    %26 = arith.shrui %24, %25 : vector<8x1024xi32>
    %27 = arith.sitofp %26 : vector<8x1024xi32> to vector<8x1024xf32>
    %cst = arith.constant 5.96046448E-8 : f32
    %28 = vector.broadcast %cst : f32 to vector<8x1024xf32>
    %29 = arith.mulf %27, %28 : vector<8x1024xf32>
    %cst_3 = arith.constant 9.99999968E-21 : f32
    %30 = vector.broadcast %cst_3 : f32 to vector<8x1024xf32>
    %31 = arith.addf %29, %30 : vector<8x1024xf32>
    %cst_4 = arith.constant 1.000000e+00 : f32
    %32 = vector.broadcast %cst_4 : f32 to vector<8x1024xf32>
    %33 = arith.subf %32, %29 : vector<8x1024xf32>
    %cst_5 = arith.constant 9.99999968E-21 : f32
    %34 = vector.broadcast %cst_5 : f32 to vector<8x1024xf32>
    %35 = arith.addf %33, %34 : vector<8x1024xf32>
    %36 = arith.divf %31, %35 : vector<8x1024xf32>
    %37 = math.log %36 : vector<8x1024xf32>
    %38 = arith.addf %0, %37 : vector<8x1024xf32>
    %cst_6 = arith.constant 0.204658598 : f32
    %39 = vector.broadcast %cst_6 : f32 to vector<8x1024xf32>
    %40 = arith.mulf %38, %39 : vector<8x1024xf32>
    %41 = arith.negf %40 : vector<8x1024xf32>
    %42 = math.exp %41 : vector<8x1024xf32>
    %cst_7 = arith.constant 1.000000e+00 : f32
    %43 = vector.broadcast %cst_7 : f32 to vector<8x1024xf32>
    %44 = arith.addf %43, %42 : vector<8x1024xf32>
    %45 = arith.divf %43, %44 : vector<8x1024xf32>
    %c0_8 = arith.constant 0 : index
    %c0_9 = arith.constant 0 : index
    %46 = vector.load %arg2[%c0_8, %c0_9] : memref<8x1024xf32, #tpu.memory_space<vmem>>, vector<8x1024xf32>
    tpu.vector_store %arg2[%c0_8, %c0_9], %45 {strides = array<i32>} : memref<8x1024xf32, #tpu.memory_space<vmem>>, vector<8x1024xf32>,
    return
  }
  func.func @transform_0(%arg0: i32) -> (i32, i32) {
    %c0_i32 = arith.constant 0 : i32
    %c0_i32_0 = arith.constant 0 : i32
    return %arg0, %c0_i32 : i32, i32
  }
  func.func @transform_1(%arg0: i32) -> (i32, i32) {
    %c0_i32 = arith.constant 0 : i32
    %c0_i32_0 = arith.constant 0 : i32
    return %arg0, %c0_i32 : i32, i32
  }
}

</mosaic_0001>

<llo_original>
// kernel: tpu_custom_call.1
$region0: #{tpu_custom_call.1}
  #allocation0 [shape = 'u32[]', space=smem, size = 0x4, offset = 0x4, fixed_abs, tag = 'smem constant byte address 0x4 - core index']
  #allocation1 [shape = 'u32[144,128]{1,0:T(1,128)}', space=vmem, size = 0x12000, scoped, tag = 'internal scratch']
  %s0 = inlined_call_operand.hbm [shape: f32[8,1024], index: 0, kind: input, shape index: {}]
  %s1 = inlined_call_operand.hbm [shape: f32[8,1024], index: 1, kind: output, shape index: {}]
  %s2 = sld [smem:[#allocation0]]
  $region18: #{tpu_custom_call.1} parent=0
    _
  %s4 = ssub.s32 1, %s2
  %s5 = scalar_select 0, %s4, %s2
  $region1: #{tpu_custom_call.1} parent=0
    #allocation2 [shape = 'u8[32768]{0}', space=vmem, size = 0x8000, scoped, tag = 'input window, operand 0, single buffered']
    #allocation3 [shape = 's32[1]{0}', space=sflag, size = 0x4, scoped, tag = 'scoped memory for tpu_custom_call.1']
    #allocation4 [shape = 's32[1]{0}', space=sflag, size = 0x4, scoped, tag = 'scoped memory for tpu_custom_call.1']
    #allocation5 [shape = 'u8[32768]{0}', space=vmem, size = 0x8000, scoped, tag = 'output window, operand 0, single buffered']
    %6 = vsyncpa [#allocation3], 0
    %7 = vsyncpa [#allocation4], 0
    // Predicated region
    $region2: #{tpu_custom_call.1} parent=1 // pred_check
      _
    $region3: #{tpu_custom_call.1} parent=1 // pred_check_branch
      %9 = sbr.rel (0) target = $region5
    $region4: #{tpu_custom_call.1} parent=1 // pred_region
      %s11 = ssub.s32 1024, 1024
      %12 = vsyncadd [#allocation3], %s11
      %s14 = sshll.u32 [#allocation2], 4
      %s15 = int_to_ptr.vmem [resolvable:$true] %s14
      %17 = dma.hbm_to_vmem [thread:$0]  %s0, 1024, %s15, [#allocation3]
    $region5: #{tpu_custom_call.1} parent=1 // pred_fallthru
      _
    // Predicated region
    $region6: #{tpu_custom_call.1} parent=1 // pred_check
      _
    $region7: #{tpu_custom_call.1} parent=1 // pred_check_branch
      %19 = sbr.rel (0) target = $region9
    $region8: #{tpu_custom_call.1} parent=1 // pred_region
      %20 = dma.done [#allocation3], 1024
    $region9: #{tpu_custom_call.1} parent=1 // pred_fallthru
      _
    %v21 = vld [vmem:[#allocation2] sm:$0xff]
    %v22 = vld [vmem:[#allocation2 + $0x8] sm:$0xff]
    %v23 = vld [vmem:[#allocation2 + $0x10] sm:$0xff]
    %v24 = vld [vmem:[#allocation2 + $0x18] sm:$0xff]
    %v25 = vld [vmem:[#allocation2 + $0x20] sm:$0xff]
    %v26 = vld [vmem:[#allocation2 + $0x28] sm:$0xff]
    %v27 = vld [vmem:[#allocation2 + $0x30] sm:$0xff]
    %v28 = vld [vmem:[#allocation2 + $0x38] sm:$0xff]
    %v29 = vlaneseq
    %v30 = vshrl.u32 %v29, 7
    %v31 = vlaneseq
    %v32 = vand.u32 %v31, 127
    %v33 = vadd.s32 %v32, 128
    %v34 = vadd.s32 %v32, 256
    %v35 = vadd.s32 %v32, 384
    %v36 = vadd.s32 %v32, 512
    %v37 = vadd.s32 %v32, 640
    %v38 = vadd.s32 %v32, 768
    %v39 = vadd.s32 %v32, 896
    %s40 = smul.u32 0, 8
    %v41 = vstv %s40
    %v42 = vadd.s32 %v41, %v30
    %v43 = vmul.u32 %v42, 1024
    %v44 = vadd.s32 %v43, %v32
    %v45 = vadd.s32 %v43, %v33
    %v46 = vadd.s32 %v43, %v34
    %v47 = vadd.s32 %v43, %v35
    %v48 = vadd.s32 %v43, %v36
    %v49 = vadd.s32 %v43, %v37
    %v50 = vadd.s32 %v43, %v38
    %v51 = vadd.s32 %v43, %v39
    %v52 = vshrl.u32 %v44, 16
    %v53 = vshrl.u32 %v45, 16
    %v54 = vshrl.u32 %v46, 16
    %v55 = vshrl.u32 %v47, 16
    %v56 = vshrl.u32 %v48, 16
    %v57 = vshrl.u32 %v49, 16
    %v58 = vshrl.u32 %v50, 16
    %v59 = vshrl.u32 %v51, 16
    %v60 = vxor.u32 %v44, %v52
    %v61 = vxor.u32 %v45, %v53
    %v62 = vxor.u32 %v46, %v54
    %v63 = vxor.u32 %v47, %v55
    %v64 = vxor.u32 %v48, %v56
    %v65 = vxor.u32 %v49, %v57
    %v66 = vxor.u32 %v50, %v58
    %v67 = vxor.u32 %v51, %v59
    %v68 = vmul.u32 %v60, 2146121005
    %v69 = vmul.u32 %v61, 2146121005
    %v70 = vmul.u32 %v62, 2146121005
    %v71 = vmul.u32 %v63, 2146121005
    %v72 = vmul.u32 %v64, 2146121005
    %v73 = vmul.u32 %v65, 2146121005
    %v74 = vmul.u32 %v66, 2146121005
    %v75 = vmul.u32 %v67, 2146121005
    %v76 = vshrl.u32 %v68, 15
    %v77 = vshrl.u32 %v69, 15
    %v78 = vshrl.u32 %v70, 15
    %v79 = vshrl.u32 %v71, 15
    %v80 = vshrl.u32 %v72, 15
    %v81 = vshrl.u32 %v73, 15
    %v82 = vshrl.u32 %v74, 15
    %v83 = vshrl.u32 %v75, 15
    %v84 = vxor.u32 %v68, %v76
    %v85 = vxor.u32 %v69, %v77
    %v86 = vxor.u32 %v70, %v78
    %v87 = vxor.u32 %v71, %v79
    %v88 = vxor.u32 %v72, %v80
    %v89 = vxor.u32 %v73, %v81
    %v90 = vxor.u32 %v74, %v82
    %v91 = vxor.u32 %v75, %v83
    %v92 = vmul.u32 %v84, 2221713035
    %v93 = vmul.u32 %v85, 2221713035
    %v94 = vmul.u32 %v86, 2221713035
    %v95 = vmul.u32 %v87, 2221713035
    %v96 = vmul.u32 %v88, 2221713035
    %v97 = vmul.u32 %v89, 2221713035
    %v98 = vmul.u32 %v90, 2221713035
    %v99 = vmul.u32 %v91, 2221713035
    %v100 = vshrl.u32 %v92, 16
    %v101 = vshrl.u32 %v93, 16
    %v102 = vshrl.u32 %v94, 16
    %v103 = vshrl.u32 %v95, 16
    %v104 = vshrl.u32 %v96, 16
    %v105 = vshrl.u32 %v97, 16
    %v106 = vshrl.u32 %v98, 16
    %v107 = vshrl.u32 %v99, 16
    %v108 = vxor.u32 %v92, %v100
    %v109 = vxor.u32 %v93, %v101
    %v110 = vxor.u32 %v94, %v102
    %v111 = vxor.u32 %v95, %v103
    %v112 = vxor.u32 %v96, %v104
    %v113 = vxor.u32 %v97, %v105
    %v114 = vxor.u32 %v98, %v106
    %v115 = vxor.u32 %v99, %v107
    %v116 = vshrl.u32 %v108, 8
    %v117 = vshrl.u32 %v109, 8
    %v118 = vshrl.u32 %v110, 8
    %v119 = vshrl.u32 %v111, 8
    %v120 = vshrl.u32 %v112, 8
    %v121 = vshrl.u32 %v113, 8
    %v122 = vshrl.u32 %v114, 8
    %v123 = vshrl.u32 %v115, 8
    %v124 = vcvt.s32.f32 %v116
    %v125 = vcvt.s32.f32 %v117
    %v126 = vcvt.s32.f32 %v118
    %v127 = vcvt.s32.f32 %v119
    %v128 = vcvt.s32.f32 %v120
    %v129 = vcvt.s32.f32 %v121
    %v130 = vcvt.s32.f32 %v122
    %v131 = vcvt.s32.f32 %v123
    %v132 = vmul.f32 %v124, 5.9604645e-08
    %v133 = vmul.f32 %v125, 5.9604645e-08
    %v134 = vmul.f32 %v126, 5.9604645e-08
    %v135 = vmul.f32 %v127, 5.9604645e-08
    %v136 = vmul.f32 %v128, 5.9604645e-08
    %v137 = vmul.f32 %v129, 5.9604645e-08
    %v138 = vmul.f32 %v130, 5.9604645e-08
    %v139 = vmul.f32 %v131, 5.9604645e-08
    %v140 = vadd.f32 %v132, 1e-20
    %v141 = vadd.f32 %v133, 1e-20
    %v142 = vadd.f32 %v134, 1e-20
    %v143 = vadd.f32 %v135, 1e-20
    %v144 = vadd.f32 %v136, 1e-20
    %v145 = vadd.f32 %v137, 1e-20
    %v146 = vadd.f32 %v138, 1e-20
    %v147 = vadd.f32 %v139, 1e-20
    %v148 = vsub.f32 1.0, %v132
    %v149 = vsub.f32 1.0, %v133
    %v150 = vsub.f32 1.0, %v134
    %v151 = vsub.f32 1.0, %v135
    %v152 = vsub.f32 1.0, %v136
    %v153 = vsub.f32 1.0, %v137
    %v154 = vsub.f32 1.0, %v138
    %v155 = vsub.f32 1.0, %v139
    %v156 = vadd.f32 %v148, 1e-20
    %v157 = vadd.f32 %v149, 1e-20
    %v158 = vadd.f32 %v150, 1e-20
    %v159 = vadd.f32 %v151, 1e-20
    %v160 = vadd.f32 %v152, 1e-20
    %v161 = vadd.f32 %v153, 1e-20
    %v162 = vadd.f32 %v154, 1e-20
    %v163 = vadd.f32 %v155, 1e-20
    %v164 = vrcp.pop %v156
    %v165 = vmul.f32 %v140, %v164
    %v166 = vrcp.pop %v157
    %v167 = vmul.f32 %v141, %v166
    %v168 = vrcp.pop %v158
    %v169 = vmul.f32 %v142, %v168
    %v170 = vrcp.pop %v159
    %v171 = vmul.f32 %v143, %v170
    %v172 = vrcp.pop %v160
    %v173 = vmul.f32 %v144, %v172
    %v174 = vrcp.pop %v161
    %v175 = vmul.f32 %v145, %v174
    %v176 = vrcp.pop %v162
    %v177 = vmul.f32 %v146, %v176
    %v178 = vrcp.pop %v163
    %v179 = vmul.f32 %v147, %v178
    %v180 = vlog2.pop %v165
    %v181 = vmul.f32 %v180, 0.6931472
    %v182 = vlog2.pop %v167
    %v183 = vmul.f32 %v182, 0.6931472
    %v184 = vlog2.pop %v169
    %v185 = vmul.f32 %v184, 0.6931472
    %v186 = vlog2.pop %v171
    %v187 = vmul.f32 %v186, 0.6931472
    %v188 = vlog2.pop %v173
    %v189 = vmul.f32 %v188, 0.6931472
    %v190 = vlog2.pop %v175
    %v191 = vmul.f32 %v190, 0.6931472
    %v192 = vlog2.pop %v177
    %v193 = vmul.f32 %v192, 0.6931472
    %v194 = vlog2.pop %v179
    %v195 = vmul.f32 %v194, 0.6931472
    %v196 = vadd.f32 %v21, %v181
    %v197 = vadd.f32 %v22, %v183
    %v198 = vadd.f32 %v23, %v185
    %v199 = vadd.f32 %v24, %v187
    %v200 = vadd.f32 %v25, %v189
    %v201 = vadd.f32 %v26, %v191
    %v202 = vadd.f32 %v27, %v193
    %v203 = vadd.f32 %v28, %v195
    %v204 = vmul.f32 %v196, 0.2046586
    %v205 = vmul.f32 %v197, 0.2046586
    %v206 = vmul.f32 %v198, 0.2046586
    %v207 = vmul.f32 %v199, 0.2046586
    %v208 = vmul.f32 %v200, 0.2046586
    %v209 = vmul.f32 %v201, 0.2046586
    %v210 = vmul.f32 %v202, 0.2046586
    %v211 = vmul.f32 %v203, 0.2046586
    %v212 = vxor.u32 %v204, 2147483648
    %v213 = vxor.u32 %v205, 2147483648
    %v214 = vxor.u32 %v206, 2147483648
    %v215 = vxor.u32 %v207, 2147483648
    %v216 = vxor.u32 %v208, 2147483648
    %v217 = vxor.u32 %v209, 2147483648
    %v218 = vxor.u32 %v210, 2147483648
    %v219 = vxor.u32 %v211, 2147483648
    %v220 = vmul.f32 %v212, 1.442695
    %v221 = vpow.pop %v220
    %v222 = vmul.f32 %v213, 1.442695
    %v223 = vpow.pop %v222
    %v224 = vmul.f32 %v214, 1.442695
    %v225 = vpow.pop %v224
    %v226 = vmul.f32 %v215, 1.442695
    %v227 = vpow.pop %v226
    %v228 = vmul.f32 %v216, 1.442695
    %v229 = vpow.pop %v228
    %v230 = vmul.f32 %v217, 1.442695
    %v231 = vpow.pop %v230
    %v232 = vmul.f32 %v218, 1.442695
    %v233 = vpow.pop %v232
    %v234 = vmul.f32 %v219, 1.442695
    %v235 = vpow.pop %v234
    %v236 = vadd.f32 %v221, 1.0
    %v237 = vadd.f32 %v223, 1.0
    %v238 = vadd.f32 %v225, 1.0
    %v239 = vadd.f32 %v227, 1.0
    %v240 = vadd.f32 %v229, 1.0
    %v241 = vadd.f32 %v231, 1.0
    %v242 = vadd.f32 %v233, 1.0
    %v243 = vadd.f32 %v235, 1.0
    %v244 = vrcp.pop %v236
    %v245 = vmul.f32 1.0, %v244
    %v246 = vrcp.pop %v237
    %v247 = vmul.f32 1.0, %v246
    %v248 = vrcp.pop %v238
    %v249 = vmul.f32 1.0, %v248
    %v250 = vrcp.pop %v239
    %v251 = vmul.f32 1.0, %v250
    %v252 = vrcp.pop %v240
    %v253 = vmul.f32 1.0, %v252
    %v254 = vrcp.pop %v241
    %v255 = vmul.f32 1.0, %v254
    %v256 = vrcp.pop %v242
    %v257 = vmul.f32 1.0, %v256
    %v258 = vrcp.pop %v243
    %v259 = vmul.f32 1.0, %v258
    %260 = vst [vmem:[#allocation5] sm:$0xff] %v245
    %261 = vst [vmem:[#allocation5 + $0x8] sm:$0xff] %v247
    %262 = vst [vmem:[#allocation5 + $0x10] sm:$0xff] %v249
    %263 = vst [vmem:[#allocation5 + $0x18] sm:$0xff] %v251
    %264 = vst [vmem:[#allocation5 + $0x20] sm:$0xff] %v253
    %265 = vst [vmem:[#allocation5 + $0x28] sm:$0xff] %v255
    %266 = vst [vmem:[#allocation5 + $0x30] sm:$0xff] %v257
    %267 = vst [vmem:[#allocation5 + $0x38] sm:$0xff] %v259
    // Predicated region
    $region10: #{tpu_custom_call.1} parent=1 // pred_check
      _
    $region11: #{tpu_custom_call.1} parent=1 // pred_check_branch
      %269 = sbr.rel (0) target = $region13
    $region12: #{tpu_custom_call.1} parent=1 // pred_region
      %s271 = ssub.s32 1024, 1024
      %272 = vsyncadd [#allocation4], %s271
      %s274 = sshll.u32 [#allocation5], 4
      %s275 = int_to_ptr.vmem [resolvable:$true] %s274
      %277 = dma.vmem_to_hbm [thread:$0]  %s275, 1024, %s1, [#allocation4]
    $region13: #{tpu_custom_call.1} parent=1 // pred_fallthru
      _
    // Predicated region
    $region14: #{tpu_custom_call.1} parent=1 // pred_check
      _
    $region15: #{tpu_custom_call.1} parent=1 // pred_check_branch
      %279 = sbr.rel (0) target = $region17
    $region16: #{tpu_custom_call.1} parent=1 // pred_region
      %280 = dma.done [#allocation4], 1024
    $region17: #{tpu_custom_call.1} parent=1 // pred_fallthru
      _
    %281 = vsyncpa [#allocation3], 1
    %282 = vsyncpa [#allocation4], 1

</llo_original>
